<compile_context>
chip_gen: v7x
topology: tpu7x:2x2x1
jax: 0.10.0
libtpu: 0.0.40
codegen_flags: <defaults>
</compile_context>

<pallas_src>
import functools
import math

import jax
import jax.numpy as jnp
from jax.experimental import pallas as pl
from jax.experimental.pallas import tpu as pltpu

LOG_SIG_MAX = 2.0
LOG_SIG_MIN = -16.0
EPSILON = 1e-06  # tanh-correction epsilon (module-level `epsilon`)
STATIC_LOG_STD = -25.0  # force_log_std constant in sample()


def _sample_kernel(*refs, transform_rv, clamp, static_cov,
                   action_scale, action_bias):
    # Transposed layout: all tiles are [A, TB] (action dim on sublanes, batch
    # on lanes); log-prob tile is [1, TB].
    if static_cov:
        mean_ref, noise_ref, action_ref, logp_ref, mean_out_ref = refs
    else:
        mean_ref, log_std_ref, noise_ref, action_ref, logp_ref, mean_out_ref = refs

    mean = mean_ref[...]
    noise = noise_ref[...]
    num_actions = mean.shape[0]
    half_log_2pi = 0.5 * math.log(2.0 * math.pi)

    if static_cov:
        # log_std is overwritten with a constant; skip its HBM stream and fold
        # exp(-25) / the -log_std term into compile-time constants.
        std = math.exp(STATIC_LOG_STD)
        x_t = mean + std * noise
        base = -0.5 * (noise * noise)
        const = -num_actions * (STATIC_LOG_STD + half_log_2pi)
    else:
        log_std = log_std_ref[...]
        if clamp:
            log_std = jnp.clip(log_std, LOG_SIG_MIN, LOG_SIG_MAX)
        std = jnp.exp(log_std)
        x_t = mean + std * noise
        # Normal(mean, std).log_prob(x_t) with (x_t - mean)/std == noise.
        base = -0.5 * (noise * noise) - log_std
        const = -num_actions * half_log_2pi

    if transform_rv:
        y_t = jnp.tanh(x_t)
        one_m_y2 = 1.0 - y_t * y_t
        if action_scale == 1.0:
            corr = jnp.log(one_m_y2 + EPSILON)
            action = y_t if action_bias == 0.0 else y_t + action_bias
            mean_sq = jnp.tanh(mean)
            if action_bias != 0.0:
                mean_sq = mean_sq + action_bias
        else:
            corr = jnp.log(action_scale * one_m_y2 + EPSILON)
            action = y_t * action_scale + action_bias
            mean_sq = jnp.tanh(mean) * action_scale + action_bias
        per_elem = base - corr
        mean_out = mean_sq
    else:
        action = x_t
        per_elem = base
        mean_out = mean

    # Reduce over the action (sublane) axis -> lane-dense [1, TB] output.
    logp_ref[...] = jnp.sum(per_elem, axis=0, keepdims=True) + const
    action_ref[...] = action
    mean_out_ref[...] = mean_out


def _pick_batch_tile(batch):
    # Largest lane-aligned tile that evenly divides the batch; fall back to a
    # single full-extent block for small/ragged batches.  Tiles stay small
    # enough for the default scoped VMEM on v5e/v6e/v7x.
    for tb in (2048, 1024, 512, 256, 128):
        if batch % tb == 0:
            return tb
    return batch


def policy_sample(mean, log_std, noise, *,
                  transform_rv=True, clamp=True, static_cov=False,
                  action_scale=1.0, action_bias=0.0):
    """Pallas implementation of Policy.sample(state, reparam=True), given
    forward()'s outputs (mean, log_std) [B, A] and standard-normal noise.

    Returns (action [B, A], log_prob [B, 1], squashed_mean [B, A])."""
    B, A = mean.shape

    # Lane-dense layout: batch on lanes, action dim on sublanes.
    mean_t = jnp.transpose(mean)
    noise_t = jnp.transpose(noise)
    if static_cov:
        inputs = (mean_t, noise_t)           # log_std stream not needed
    else:
        inputs = (mean_t, jnp.transpose(log_std), noise_t)

    tb = _pick_batch_tile(B)
    grid = (B // tb,)
    spec_ab = pl.BlockSpec((A, tb), lambda i: (0, i))
    spec_1b = pl.BlockSpec((1, tb), lambda i: (0, i))

    kernel = functools.partial(
        _sample_kernel,
        transform_rv=transform_rv, clamp=clamp, static_cov=static_cov,
        action_scale=float(action_scale), action_bias=float(action_bias))

    action_t, logp_t, mean_sq_t = pl.pallas_call(
        kernel,
        grid=grid,
        in_specs=[spec_ab] * len(inputs),
        out_specs=(spec_ab, spec_1b, spec_ab),
        out_shape=(
            jax.ShapeDtypeStruct((A, B), jnp.float32),  # action (transposed)
            jax.ShapeDtypeStruct((1, B), jnp.float32),  # log_prob (transposed)
            jax.ShapeDtypeStruct((A, B), jnp.float32),  # squashed mean (transposed)
        ),
        compiler_params=pltpu.CompilerParams(
            dimension_semantics=("parallel",)),
    )(*inputs)

    return (jnp.transpose(action_t),
            jnp.transpose(logp_t),
            jnp.transpose(mean_sq_t))


def _reference_sample(mean, log_std, noise, *,
                      transform_rv=True, clamp=True, static_cov=False,
                      action_scale=1.0, action_bias=0.0):
    """Pure-JAX reference of the PyTorch sample() math (reparam=True).
    Uses the exact identity (x_t - mean)/std == noise for the Normal
    log-prob of the reparameterized sample."""
    if clamp:
        log_std = jnp.clip(log_std, LOG_SIG_MIN, LOG_SIG_MAX)
    if static_cov:
        log_std = jnp.full_like(log_std, STATIC_LOG_STD)
    std = jnp.exp(log_std)
    x_t = mean + std * noise
    log_prob = -0.5 * noise ** 2 - log_std - 0.5 * math.log(2.0 * math.pi)
    if transform_rv:
        y_t = jnp.tanh(x_t)
        action = y_t * action_scale + action_bias
        log_prob = log_prob - jnp.log(action_scale * (1.0 - y_t ** 2) + EPSILON)
        mean_o = jnp.tanh(mean) * action_scale + action_bias
    else:
        action = x_t
        mean_o = mean
    logp = jnp.sum(log_prob, axis=1, keepdims=True)
    return action, logp, mean_o


if __name__ == "__main__":
    # Small MuJoCo-ish shapes: batch=8, num_actions=6.
    B, A = 8, 6
    key = jax.random.PRNGKey(0)
    k_mean, k_lstd, k_noise = jax.random.split(key, 3)

    # Well-conditioned inputs (keep tanh out of deep saturation so the
    # log(1 - y^2 + eps) correction does not amplify transcendental rounding).
    mean = 0.3 * jax.random.normal(k_mean, (B, A), dtype=jnp.float32)
    log_std = 0.3 * jax.random.normal(k_lstd, (B, A), dtype=jnp.float32) - 1.0
    noise = jax.random.normal(k_noise, (B, A), dtype=jnp.float32)

    # --- main config: tanh squash + clamp, learned covariance -------------
    action, log_prob, mean_sq = policy_sample(
        mean, log_std, noise,
        transform_rv=True, clamp=True, static_cov=False)
    jax.block_until_ready((action, log_prob, mean_sq))

    ref_a, ref_lp, ref_m = _reference_sample(
        mean, log_std, noise,
        transform_rv=True, clamp=True, static_cov=False)
    assert action.shape == (B, A) and log_prob.shape == (B, 1)
    assert jnp.allclose(action, ref_a, atol=1e-4, rtol=1e-4)
    assert jnp.allclose(log_prob, ref_lp, atol=1e-2, rtol=1e-3)
    assert jnp.allclose(mean_sq, ref_m, atol=1e-4, rtol=1e-4)

    # --- static_cov config: log_std stream skipped inside the kernel ------
    action2, log_prob2, mean2 = policy_sample(
        mean, log_std, noise,
        transform_rv=False, clamp=True, static_cov=True)
    jax.block_until_ready((action2, log_prob2, mean2))

    ref_a2, ref_lp2, ref_m2 = _reference_sample(
        mean, log_std, noise,
        transform_rv=False, clamp=True, static_cov=True)
    assert jnp.allclose(action2, ref_a2, atol=1e-5, rtol=1e-5)
    assert jnp.allclose(log_prob2, ref_lp2, atol=1e-2, rtol=1e-4)
    assert jnp.allclose(mean2, ref_m2, atol=1e-6, rtol=1e-6)

    print("KERNEL_OK")
</pallas_src>

<mosaic_0001>
module attributes {stable_mosaic.version = 11 : i64} {
  func.func @_sample_kernel(%arg0: i32, %arg1: memref<6x8xf32, #tpu.memory_space<vmem>>, %arg2: memref<6x8xf32, #tpu.memory_space<vmem>>, %arg3: memref<6x8xf32, #tpu.memory_space<vmem>>, %arg4: memref<6x8xf32, #tpu.memory_space<vmem>>, %arg5: memref<1x8xf32, #tpu.memory_space<vmem>>, %arg6: memref<6x8xf32, #tpu.memory_space<vmem>>) attributes {dimension_semantics = [#tpu.dimension_semantics<parallel>], iteration_bounds = array<i64: 1>, scalar_prefetch = 0 : i64, scratch_operands = 0 : i64, tpu.core_type = #tpu.core_type<tc>, window_params = [{transform_indices = @transform_0, window_bounds = array<i64: 6, 8>}, {transform_indices = @transform_1, window_bounds = array<i64: 6, 8>}, {transform_indices = @transform_2, window_bounds = array<i64: 6, 8>}, {transform_indices = @transform_3, window_bounds = array<i64: 6, 8>}, {transform_indices = @transform_4, window_bounds = array<i64: 1, 8>}, {transform_indices = @transform_5, window_bounds = array<i64: 6, 8>}]} {
    %c0 = arith.constant 0 : index
    %c0_0 = arith.constant 0 : index
    %0 = vector.load %arg1[%c0, %c0_0] : memref<6x8xf32, #tpu.memory_space<vmem>>, vector<6x8xf32>
    %c0_1 = arith.constant 0 : index
    %c0_2 = arith.constant 0 : index
    %1 = vector.load %arg3[%c0_1, %c0_2] : memref<6x8xf32, #tpu.memory_space<vmem>>, vector<6x8xf32>
    %c0_3 = arith.constant 0 : index
    %c0_4 = arith.constant 0 : index
    %2 = vector.load %arg2[%c0_3, %c0_4] : memref<6x8xf32, #tpu.memory_space<vmem>>, vector<6x8xf32>
    %cst = arith.constant -1.600000e+01 : f32
    %cst_5 = arith.constant 2.000000e+00 : f32
    %3 = vector.broadcast %cst : f32 to vector<6x8xf32>
    %4 = arith.maximumf %3, %2 : vector<6x8xf32>
    %5 = vector.broadcast %cst_5 : f32 to vector<6x8xf32>
    %6 = arith.minimumf %5, %4 : vector<6x8xf32>
    %7 = math.exp %6 : vector<6x8xf32>
    %8 = arith.mulf %7, %1 : vector<6x8xf32>
    %9 = arith.addf %0, %8 : vector<6x8xf32>
    %10 = arith.mulf %1, %1 : vector<6x8xf32>
    %cst_6 = arith.constant -5.000000e-01 : f32
    %11 = vector.broadcast %cst_6 : f32 to vector<6x8xf32>
    %12 = arith.mulf %11, %10 : vector<6x8xf32>
    %13 = arith.subf %12, %6 : vector<6x8xf32>
    %14 = math.tanh %9 : vector<6x8xf32>
    %15 = arith.mulf %14, %14 : vector<6x8xf32>
    %cst_7 = arith.constant 1.000000e+00 : f32
    %16 = vector.broadcast %cst_7 : f32 to vector<6x8xf32>
    %17 = arith.subf %16, %15 : vector<6x8xf32>
    %cst_8 = arith.constant 9.99999997E-7 : f32
    %18 = vector.broadcast %cst_8 : f32 to vector<6x8xf32>
    %19 = arith.addf %17, %18 : vector<6x8xf32>
    %20 = math.log %19 : vector<6x8xf32>
    %21 = math.tanh %0 : vector<6x8xf32>
    %22 = arith.subf %13, %20 : vector<6x8xf32>
    %cst_9 = arith.constant dense<0.000000e+00> : vector<8xf32>
    %23 = vector.multi_reduction <add>, %22, %cst_9 [0] : vector<6x8xf32> to vector<8xf32>
    %24 = vector.shape_cast %23 : vector<8xf32> to vector<1x8xf32>
    %cst_10 = arith.constant -5.51363134 : f32
    %25 = vector.broadcast %cst_10 : f32 to vector<1x8xf32>
    %26 = arith.addf %24, %25 : vector<1x8xf32>
    %c0_11 = arith.constant 0 : index
    %c0_12 = arith.constant 0 : index
    %27 = vector.load %arg5[%c0_11, %c0_12] : memref<1x8xf32, #tpu.memory_space<vmem>>, vector<1x8xf32>
    tpu.vector_store %arg5[%c0_11, %c0_12], %26 {strides = array<i32>} : memref<1x8xf32, #tpu.memory_space<vmem>>, vector<1x8xf32>,
    %c0_13 = arith.constant 0 : index
    %c0_14 = arith.constant 0 : index
    %28 = vector.load %arg4[%c0_13, %c0_14] : memref<6x8xf32, #tpu.memory_space<vmem>>, vector<6x8xf32>
    tpu.vector_store %arg4[%c0_13, %c0_14], %14 {strides = array<i32>} : memref<6x8xf32, #tpu.memory_space<vmem>>, vector<6x8xf32>,
    %c0_15 = arith.constant 0 : index
    %c0_16 = arith.constant 0 : index
    %29 = vector.load %arg6[%c0_15, %c0_16] : memref<6x8xf32, #tpu.memory_space<vmem>>, vector<6x8xf32>
    tpu.vector_store %arg6[%c0_15, %c0_16], %21 {strides = array<i32>} : memref<6x8xf32, #tpu.memory_space<vmem>>, vector<6x8xf32>,
    return
  }
  func.func @transform_0(%arg0: i32) -> (i32, i32) {
    %c0_i32 = arith.constant 0 : i32
    %c0_i32_0 = arith.constant 0 : i32
    return %c0_i32, %arg0 : i32, i32
  }
  func.func @transform_1(%arg0: i32) -> (i32, i32) {
    %c0_i32 = arith.constant 0 : i32
    %c0_i32_0 = arith.constant 0 : i32
    return %c0_i32, %arg0 : i32, i32
  }
  func.func @transform_2(%arg0: i32) -> (i32, i32) {
    %c0_i32 = arith.constant 0 : i32
    %c0_i32_0 = arith.constant 0 : i32
    return %c0_i32, %arg0 : i32, i32
  }
  func.func @transform_3(%arg0: i32) -> (i32, i32) {
    %c0_i32 = arith.constant 0 : i32
    %c0_i32_0 = arith.constant 0 : i32
    return %c0_i32, %arg0 : i32, i32
  }
  func.func @transform_4(%arg0: i32) -> (i32, i32) {
    %c0_i32 = arith.constant 0 : i32
    %c0_i32_0 = arith.constant 0 : i32
    return %c0_i32, %arg0 : i32, i32
  }
  func.func @transform_5(%arg0: i32) -> (i32, i32) {
    %c0_i32 = arith.constant 0 : i32
    %c0_i32_0 = arith.constant 0 : i32
    return %c0_i32, %arg0 : i32, i32
  }
}

</mosaic_0001>

<llo_original>
// kernel: tpu_custom_call.1
$region0: #{tpu_custom_call.1}
  #allocation0 [shape = 'u32[]', space=smem, size = 0x4, offset = 0x4, fixed_abs, tag = 'smem constant byte address 0x4 - core index']
  #allocation1 [shape = 'u32[144,128]{1,0:T(1,128)}', space=vmem, size = 0x12000, scoped, tag = 'internal scratch']
  %s0 = inlined_call_operand.hbm [shape: f32[6,8], index: 0, kind: input, shape index: {}]
  %s1 = inlined_call_operand.hbm [shape: f32[6,8], index: 1, kind: input, shape index: {}]
  %s2 = inlined_call_operand.hbm [shape: f32[6,8], index: 2, kind: input, shape index: {}]
  %s3 = inlined_call_operand.hbm [shape: f32[6,8], index: 3, kind: output, shape index: {0}]
  %s4 = inlined_call_operand.hbm [shape: f32[1,8], index: 4, kind: output, shape index: {1}]
  %s5 = inlined_call_operand.hbm [shape: f32[6,8], index: 5, kind: output, shape index: {2}]
  %6 = xla_tuple %s3, %s4, %s5
  %s7 = sld [smem:[#allocation0]]
  $region50: #{tpu_custom_call.1} parent=0
    _
  %s9 = ssub.s32 1, %s7
  %s10 = scalar_select 0, %s9, %s7
  $region1: #{tpu_custom_call.1} parent=0
    #allocation2 [shape = 'u8[4096]{0}', space=vmem, size = 0x1000, scoped, tag = 'input window, operand 0, single buffered']
    #allocation3 [shape = 's32[1]{0}', space=sflag, size = 0x4, scoped, tag = 'scoped memory for tpu_custom_call.1']
    #allocation4 [shape = 's32[1]{0}', space=sflag, size = 0x4, scoped, tag = 'scoped memory for tpu_custom_call.1']
    #allocation5 [shape = 'u8[4096]{0}', space=vmem, size = 0x1000, scoped, tag = 'input window, operand 1, single buffered']
    #allocation6 [shape = 's32[1]{0}', space=sflag, size = 0x4, scoped, tag = 'scoped memory for tpu_custom_call.1']
    #allocation7 [shape = 'u8[4096]{0}', space=vmem, size = 0x1000, scoped, tag = 'input window, operand 2, single buffered']
    #allocation8 [shape = 'u8[4096]{0}', space=vmem, size = 0x1000, scoped, tag = 'output window, operand 0, single buffered']
    #allocation9 [shape = 'u8[512]{0}', space=vmem, size = 0x400, scoped, tag = 'output window, operand 1, single buffered']
    #allocation10 [shape = 's32[1]{0}', space=sflag, size = 0x4, scoped, tag = 'scoped memory for tpu_custom_call.1']
    #allocation11 [shape = 'u8[4096]{0}', space=vmem, size = 0x1000, scoped, tag = 'output window, operand 2, single buffered']
    %11 = vsyncpa [#allocation3], 0
    %12 = vsyncpa [#allocation6], 0
    %13 = vsyncpa [#allocation4], 0
    %14 = vsyncpa [#allocation10], 0
    // Predicated region
    $region2: #{tpu_custom_call.1} parent=1 // pred_check
      _
    $region3: #{tpu_custom_call.1} parent=1 // pred_check_branch
      %16 = sbr.rel (0) target = $region5
    $region4: #{tpu_custom_call.1} parent=1 // pred_region
      %s18 = ssub.s32 128, 128
      %19 = vsyncadd [#allocation3], %s18
      %s21 = sshll.u32 [#allocation2], 4
      %s22 = int_to_ptr.vmem [resolvable:$true] %s21
      %24 = dma.hbm_to_vmem [thread:$0]  %s0, 128, %s22, [#allocation3]
    $region5: #{tpu_custom_call.1} parent=1 // pred_fallthru
      _
    // Predicated region
    $region6: #{tpu_custom_call.1} parent=1 // pred_check
      _
    $region7: #{tpu_custom_call.1} parent=1 // pred_check_branch
      %26 = sbr.rel (0) target = $region9
    $region8: #{tpu_custom_call.1} parent=1 // pred_region
      %s28 = ssub.s32 128, 128
      %29 = vsyncadd [#allocation6], %s28
      %s31 = sshll.u32 [#allocation5], 4
      %s32 = int_to_ptr.vmem [resolvable:$true] %s31
      %34 = dma.hbm_to_vmem [thread:$0]  %s1, 128, %s32, [#allocation6]
    $region9: #{tpu_custom_call.1} parent=1 // pred_fallthru
      _
    // Predicated region
    $region10: #{tpu_custom_call.1} parent=1 // pred_check
      _
    $region11: #{tpu_custom_call.1} parent=1 // pred_check_branch
      %36 = sbr.rel (0) target = $region13
    $region12: #{tpu_custom_call.1} parent=1 // pred_region
      %s38 = ssub.s32 128, 128
      %39 = vsyncadd [#allocation6], %s38
      %s41 = sshll.u32 [#allocation7], 4
      %s42 = int_to_ptr.vmem [resolvable:$true] %s41
      %44 = dma.hbm_to_vmem [thread:$0]  %s2, 128, %s42, [#allocation6]
    $region13: #{tpu_custom_call.1} parent=1 // pred_fallthru
      _
    // Predicated region
    $region14: #{tpu_custom_call.1} parent=1 // pred_check
      _
    $region15: #{tpu_custom_call.1} parent=1 // pred_check_branch
      %46 = sbr.rel (0) target = $region17
    $region16: #{tpu_custom_call.1} parent=1 // pred_region
      %47 = dma.done [#allocation3], 128
    $region17: #{tpu_custom_call.1} parent=1 // pred_fallthru
      _
    // Predicated region
    $region18: #{tpu_custom_call.1} parent=1 // pred_check
      _
    $region19: #{tpu_custom_call.1} parent=1 // pred_check_branch
      %49 = sbr.rel (0) target = $region21
    $region20: #{tpu_custom_call.1} parent=1 // pred_region
      %50 = dma.done [#allocation6], 128
    $region21: #{tpu_custom_call.1} parent=1 // pred_fallthru
      _
    // Predicated region
    $region22: #{tpu_custom_call.1} parent=1 // pred_check
      _
    $region23: #{tpu_custom_call.1} parent=1 // pred_check_branch
      %52 = sbr.rel (0) target = $region25
    $region24: #{tpu_custom_call.1} parent=1 // pred_region
      %53 = dma.done [#allocation6], 128
    $region25: #{tpu_custom_call.1} parent=1 // pred_fallthru
      _
    %v54 = vld [vmem:[#allocation2] sm:$0x3f]
    %v55 = vld [vmem:[#allocation7] sm:$0x3f]
    %v56 = vld [vmem:[#allocation5] sm:$0x3f]
    %v57 = vmax.f32 %v56, -16.0
    %v58 = vmin.f32 %v57, 2.0
    %v59 = vmul.f32 %v58, 1.442695
    %v60 = vpow.pop %v59
    %v61 = vmul.f32 %v60, %v55
    %v62 = vadd.f32 %v54, %v61
    %v63 = vmul.f32 %v55, %v55
    %v64 = vmul.f32 %v63, -0.5
    %v65 = vsub.f32 %v64, %v58
    %v66 = vtanh.pop %v62
    %v67 = vmul.f32 %v66, %v66
    %v68 = vsub.f32 1.0, %v67
    %v69 = vadd.f32 %v68, 1e-06
    %v70 = vlog2.pop %v69
    %v71 = vmul.f32 %v70, 0.6931472
    %v72 = vtanh.pop %v54
    %v73 = vsub.f32 %v65, %v71
    %vm74 = vcmask 62464
    %v75 = vsel %vm74, %v73, 0.0
    %v76 = vrot.slane %v75, 4
    %v77 = vadd.f32 %v75, %v76
    %v78 = vrot.slane %v77, 2
    %v79 = vadd.f32 %v77, %v78
    %v80 = vrot.slane %v79, 1
    %v81 = vadd.f32 %v79, %v80
    %v82 = vadd.f32 %v81, -5.5136313
    %vm83 = vcmask 57344
    %84 = vst.msk [vmem:[#allocation9] sm:$0x1] %vm83, %v82
    %85 = vst.msk [vmem:[#allocation8] sm:$0x3f] %vm74, %v66
    %86 = vst.msk [vmem:[#allocation11] sm:$0x3f] %vm74, %v72
    // Predicated region
    $region26: #{tpu_custom_call.1} parent=1 // pred_check
      _
    $region27: #{tpu_custom_call.1} parent=1 // pred_check_branch
      %88 = sbr.rel (0) target = $region29
    $region28: #{tpu_custom_call.1} parent=1 // pred_region
      %s90 = ssub.s32 128, 128
      %91 = vsyncadd [#allocation4], %s90
      %s93 = sshll.u32 [#allocation8], 4
      %s94 = int_to_ptr.vmem [resolvable:$true] %s93
      %96 = dma.vmem_to_hbm [thread:$0]  %s94, 128, %s3, [#allocation4]
    $region29: #{tpu_custom_call.1} parent=1 // pred_fallthru
      _
    // Predicated region
    $region30: #{tpu_custom_call.1} parent=1 // pred_check
      _
    $region31: #{tpu_custom_call.1} parent=1 // pred_check_branch
      %98 = sbr.rel (0) target = $region33
    $region32: #{tpu_custom_call.1} parent=1 // pred_region
      %s100 = ssub.s32 16, 16
      %101 = vsyncadd [#allocation10], %s100
      %s103 = sshll.u32 [#allocation9], 4
      %s104 = int_to_ptr.vmem [resolvable:$true] %s103
      %106 = dma.vmem_to_hbm [thread:$0]  %s104, 16, %s4, [#allocation10]
    $region33: #{tpu_custom_call.1} parent=1 // pred_fallthru
      _
    // Predicated region
    $region34: #{tpu_custom_call.1} parent=1 // pred_check
      _
    $region35: #{tpu_custom_call.1} parent=1 // pred_check_branch
      %108 = sbr.rel (0) target = $region37
    $region36: #{tpu_custom_call.1} parent=1 // pred_region
      %s110 = ssub.s32 128, 128
      %111 = vsyncadd [#allocation10], %s110
      %s113 = sshll.u32 [#allocation11], 4
      %s114 = int_to_ptr.vmem [resolvable:$true] %s113
      %116 = dma.vmem_to_hbm [thread:$0]  %s114, 128, %s5, [#allocation10]
    $region37: #{tpu_custom_call.1} parent=1 // pred_fallthru
      _
    // Predicated region
    $region38: #{tpu_custom_call.1} parent=1 // pred_check
      _
    $region39: #{tpu_custom_call.1} parent=1 // pred_check_branch
      %118 = sbr.rel (0) target = $region41
    $region40: #{tpu_custom_call.1} parent=1 // pred_region
      %119 = dma.done [#allocation4], 128
    $region41: #{tpu_custom_call.1} parent=1 // pred_fallthru
      _
    // Predicated region
    $region42: #{tpu_custom_call.1} parent=1 // pred_check
      _
    $region43: #{tpu_custom_call.1} parent=1 // pred_check_branch
      %121 = sbr.rel (0) target = $region45
    $region44: #{tpu_custom_call.1} parent=1 // pred_region
      %122 = dma.done [#allocation10], 16
    $region45: #{tpu_custom_call.1} parent=1 // pred_fallthru
      _
    // Predicated region
    $region46: #{tpu_custom_call.1} parent=1 // pred_check
      _
    $region47: #{tpu_custom_call.1} parent=1 // pred_check_branch
      %124 = sbr.rel (0) target = $region49
    $region48: #{tpu_custom_call.1} parent=1 // pred_region
      %125 = dma.done [#allocation10], 128
    $region49: #{tpu_custom_call.1} parent=1 // pred_fallthru
      _
    %126 = vsyncpa [#allocation3], 1
    %127 = vsyncpa [#allocation6], 1
    %128 = vsyncpa [#allocation4], 1
    %129 = vsyncpa [#allocation10], 1

</llo_original>
